<compile_context>
chip_gen: v6e
topology: v6e:2x2x1
jax: 0.10.0
libtpu: 0.0.40
codegen_flags: <defaults>
</compile_context>

<pallas_src>
import functools

import jax
import jax.numpy as jnp
from jax.experimental import pallas as pl
from jax.experimental.pallas import tpu as pltpu

EPS = 1e-5      # nn.BatchNorm2d default eps
K = 4           # ConvTranspose2d kernel size
STRIDE = 2


# ---------------------------------------------------------------------------
# kernel: conv (block-Toeplitz polyphase matmul) + BN partial statistics
# ---------------------------------------------------------------------------
def _conv_stats_kernel(x_ref, w_ref, y_ref, stat_ref):
    """One (batch, row-block) grid step.

    x_ref   : (1, H+2, (W+2)*Cin)     lane-dense padded image (resident across row blocks)
    w_ref   : (3, (W+2)*Cin, W*4*Cout) block-Toeplitz folded weights, one per row tap
    y_ref   : (1, TR, W*4*Cout)        conv output slab, lane order (p, x, q, cout)
    stat_ref: (1, 2, W*4*Cout)         per-block per-lane [sum ; sum-of-squares] (f32)
    """
    rr = pl.program_id(1)
    tr = y_ref.shape[1]
    lanes = y_ref.shape[2]

    row0 = rr * tr
    if tr % 8 == 0:
        row0 = pl.multiple_of(row0, 8)

    acc = jnp.zeros((tr, lanes), jnp.float32)
    for a in range(3):                                    # 3 input-row taps (static unroll)
        xa = x_ref[0, pl.ds(row0 + a, tr), :]             # (TR, (W+2)*Cin) sublane slice
        acc = acc + jnp.dot(xa, w_ref[a], preferred_element_type=jnp.float32)

    y_ref[0] = acc.astype(y_ref.dtype)                    # lane-dense (TR, W*4*Cout) store
    s = jnp.sum(acc, axis=0, keepdims=True)               # (1, lanes) f32 partial sum
    ss = jnp.sum(acc * acc, axis=0, keepdims=True)        # (1, lanes) f32 partial sumsq
    stat_ref[0] = jnp.concatenate([s, ss], axis=0)        # (2, lanes), lane-dense store


# ---------------------------------------------------------------------------
# wrapper-side helpers
# ---------------------------------------------------------------------------
def _toeplitz_weights(weight, w_out):
    """PyTorch ConvTranspose2d weight (Cin, Cout, 4, 4) -> (3, (W+2)*Cin, W*4*Cout).

    Polyphase fold of the stride-2 transposed conv: w9[a, b, cin, p, q, cout] holds the
    tap connecting padded input offset (a, b) in the 3x3 neighbourhood to output phase
    (p, q) = (oy%2, ox%2); each phase uses only 4 of the 16 kernel taps.  The 3 column
    taps b are then spread into a block-Toeplitz matrix over output columns x, so the
    conv is 3 plain matmuls with rows ordered (x_in, cin) and cols (p, x_out, q, cout).
    """
    cin, cout = weight.shape[0], weight.shape[1]
    w9 = jnp.zeros((3, 3, cin, 2, 2, cout), jnp.float32)
    for a in range(3):
        for b in range(3):
            for p in range(2):
                for q in range(2):
                    if (a - p) in (0, 1) and (b - q) in (0, 1):
                        ky, kx = 3 + p - 2 * a, 3 + q - 2 * b
                        w9 = w9.at[a, b, :, p, q, :].set(
                            weight[:, :, ky, kx].astype(jnp.float32))

    wp = w_out + 2
    xb = jnp.arange(wp)[:, None]                 # padded input column
    xo = jnp.arange(w_out)[None, :]              # output column group
    b = xb - xo                                  # column tap index
    mask = (b >= 0) & (b <= 2)
    wt = jnp.take(w9, jnp.clip(b, 0, 2), axis=1)            # (3, wp, w, cin, 2, 2, cout)
    wt = wt * mask[None, :, :, None, None, None, None]
    wt = jnp.transpose(wt, (0, 1, 3, 4, 2, 5, 6))           # (3, wp, cin, p, w, q, cout)
    return wt.reshape(3, wp * cin, w_out * 4 * cout)


def _vmem_limit_bytes():
    """Generation-aware scoped-VMEM cap (v7x: 64 MiB/TC -> ~48 MiB; v5e/v6e: ~96 MiB)."""
    try:
        cap = int(pltpu.get_tpu_info().vmem_capacity_bytes)
    except Exception:
        cap = 64 * 1024 * 1024
    return int(min(cap * 3 // 4, 100 * 1024 * 1024))


def _pick_row_tile(h, w, cout, bytes_per_elem, budget_bytes):
    """Row-block height TR: whole image if the (TR, W*4*Cout) output tile fits the
    budget, else the largest multiple-of-8 divisor of H that fits."""
    row_bytes = 4 * w * cout * bytes_per_elem
    if h * row_bytes <= budget_bytes:
        return h
    for tr in range(8 * (h // 8), 0, -8):
        if h % tr == 0 and tr * row_bytes <= budget_bytes:
            return tr
    # TODO(synk): pad/mask awkward H instead of falling back to the whole image.
    return h


def upsample2_bloc(x_nchw, weight, bias, gamma, beta, *, mxu_dtype=jnp.bfloat16):
    """Forward pass of Upsample2Bloc.  x_nchw: (N, Cin, H, W) -> (N, Cout, 2H, 2W).

    `bias` is accepted for API parity but cancels analytically: training-mode BatchNorm
    subtracts the batch mean, which absorbs the constant conv bias.
    """
    del bias
    n, cin, h, w = x_nchw.shape
    cout = weight.shape[1]
    ho, wo = STRIDE * h, STRIDE * w
    wp = w + 2
    lanes = 4 * w * cout                         # output lane axis, ordered (p, x, q, cout)

    # Lane-dense padded input (N, H+2, (W+2)*Cin): full rows in the 128-lane axis.
    x = jnp.transpose(x_nchw, (0, 2, 3, 1)).astype(jnp.float32)
    xpad = jnp.pad(x, ((0, 0), (1, 1), (1, 1), (0, 0)))
    xpad = xpad.reshape(n, h + 2, wp * cin).astype(mxu_dtype)

    wt = _toeplitz_weights(weight, w).astype(mxu_dtype)      # (3, wp*cin, lanes)

    vmem_limit = _vmem_limit_bytes()
    tr = _pick_row_tile(h, w, cout, jnp.dtype(mxu_dtype).itemsize, vmem_limit // 8)
    nrb = h // tr
    grid = (n, nrb)

    y, stats = pl.pallas_call(
        _conv_stats_kernel,
        grid=grid,
        in_specs=[
            # Whole padded image per batch; same block index across the row-block axis,
            # so it stays VMEM-resident (no halo duplication, no host gather).
            pl.BlockSpec((1, h + 2, wp * cin), lambda b, rr: (b, 0, 0)),
            pl.BlockSpec((3, wp * cin, lanes), lambda b, rr: (0, 0, 0)),
        ],
        out_specs=(
            pl.BlockSpec((1, tr, lanes), lambda b, rr: (b, rr, 0)),
            pl.BlockSpec((1, 2, lanes), lambda b, rr: (b * nrb + rr, 0, 0)),
        ),
        out_shape=(
            jax.ShapeDtypeStruct((n, h, lanes), mxu_dtype),          # bf16 conv slab
            jax.ShapeDtypeStruct((n * nrb, 2, lanes), jnp.float32),  # BN partials
        ),
        compiler_params=pltpu.CompilerParams(
            dimension_semantics=("parallel", "arbitrary"),   # batches across TCs (megacore)
            vmem_limit_bytes=vmem_limit,
        ),
    )(xpad, wt)

    # ---- batch statistics: tiny XLA reduction over per-block f32 partials ----
    # TODO(synk): PyTorch also updates running_mean/running_var in training mode; that
    # state side effect does not affect the forward output and is not reproduced here.
    cnt = jnp.float32(n * ho * wo)
    per_lane = jnp.sum(stats, axis=0)                                     # (2, lanes)
    per_chan = jnp.sum(per_lane.reshape(2, lanes // cout, cout), axis=1)  # (2, cout)
    mean = per_chan[0] / cnt                     # conv-only mean (bias cancels in BN)
    var = jnp.maximum(per_chan[1] / cnt - mean * mean, 0.0)
    scale = gamma.astype(jnp.float32) * jax.lax.rsqrt(var + EPS)
    shift = beta.astype(jnp.float32) - mean * scale

    # The (p, x, q, cout) lane order makes the slab reshape straight to NHWC; the BN
    # scale/shift + ReLU fuse into the single NHWC->NCHW transpose XLA needs anyway.
    y_nhwc = y.reshape(n, ho, wo, cout).astype(jnp.float32)
    z = jnp.maximum(y_nhwc * scale + shift, 0.0)
    return jnp.transpose(z, (0, 3, 1, 2))


# ---------------------------------------------------------------------------
# pure-JAX reference (definitional scatter form of ConvTranspose2d)
# ---------------------------------------------------------------------------
def upsample2_bloc_ref(x_nchw, weight, bias, gamma, beta):
    n, cin, h, w = x_nchw.shape
    cout = weight.shape[1]
    ho, wo = STRIDE * h, STRIDE * w
    x = jnp.transpose(x_nchw, (0, 2, 3, 1)).astype(jnp.float32)
    # oy = 2*iy - 1 + ky  (shift by +1 to keep indices non-negative)
    y_big = jnp.zeros((n, ho + 2, wo + 2, cout), jnp.float32)
    for ky in range(K):
        for kx in range(K):
            contrib = jnp.einsum('nhwc,cd->nhwd', x, weight[:, :, ky, kx])
            y_big = y_big.at[:, ky:ky + 2 * h:2, kx:kx + 2 * w:2, :].add(contrib)
    y = y_big[:, 1:ho + 1, 1:wo + 1, :] + bias.reshape(1, 1, 1, cout)
    mean = jnp.mean(y, axis=(0, 1, 2), keepdims=True)
    var = jnp.mean((y - mean) ** 2, axis=(0, 1, 2), keepdims=True)
    z = gamma.reshape(1, 1, 1, cout) * (y - mean) / jnp.sqrt(var + EPS) \
        + beta.reshape(1, 1, 1, cout)
    z = jnp.maximum(z, 0.0)
    return jnp.transpose(z, (0, 3, 1, 2))


if __name__ == "__main__":
    key = jax.random.PRNGKey(0)
    k1, k2, k3, k4, k5 = jax.random.split(key, 5)

    N, Cin, Cout, H, W = 2, 4, 8, 16, 16
    x = jax.random.normal(k1, (N, Cin, H, W), jnp.float32)
    # nn.ConvTranspose2d(insize, outsize, 4): weight (Cin, Cout, 4, 4), bias (Cout,)
    weight = 0.1 * jax.random.normal(k2, (Cin, Cout, K, K), jnp.float32)
    bias = 0.1 * jax.random.normal(k3, (Cout,), jnp.float32)
    # nn.BatchNorm2d(outsize): affine params (Cout,)
    gamma = 1.0 + 0.1 * jax.random.normal(k4, (Cout,), jnp.float32)
    beta = 0.1 * jax.random.normal(k5, (Cout,), jnp.float32)

    ref = upsample2_bloc_ref(x, weight, bias, gamma, beta)

    # f32 MXU path: checks the Toeplitz/polyphase/BN algorithm at tight tolerance.
    out_f32 = jax.block_until_ready(
        jax.jit(functools.partial(upsample2_bloc, mxu_dtype=jnp.float32))(
            x, weight, bias, gamma, beta))
    assert out_f32.shape == (N, Cout, STRIDE * H, STRIDE * W), out_f32.shape
    err_f32 = float(jnp.max(jnp.abs(out_f32 - ref)))
    assert jnp.allclose(out_f32, ref, atol=1e-3, rtol=1e-3), err_f32

    # default bf16 MXU path (v5e/v6e/v7x-friendly): looser tolerance for bf16 operands.
    out_bf16 = jax.block_until_ready(
        jax.jit(upsample2_bloc)(x, weight, bias, gamma, beta))
    assert out_bf16.shape == (N, Cout, STRIDE * H, STRIDE * W), out_bf16.shape
    err_bf16 = float(jnp.max(jnp.abs(out_bf16 - ref)))
    assert jnp.allclose(out_bf16, ref, atol=5e-2, rtol=5e-2), err_bf16

    print("KERNEL_OK")
</pallas_src>

<mosaic_0001>
module attributes {stable_mosaic.version = 11 : i64} {
  func.func @_conv_stats_kernel(%arg0: i32, %arg1: i32, %arg2: memref<1x18x72xf32, #tpu.memory_space<vmem>>, %arg3: memref<3x72x512xf32, #tpu.memory_space<vmem>>, %arg4: memref<1x16x512xf32, #tpu.memory_space<vmem>>, %arg5: memref<1x2x512xf32, #tpu.memory_space<vmem>>) attributes {dimension_semantics = [#tpu.dimension_semantics<parallel>, #tpu.dimension_semantics<arbitrary>], iteration_bounds = array<i64: 2, 1>, scalar_prefetch = 0 : i64, scratch_operands = 0 : i64, tpu.core_type = #tpu.core_type<tc>, window_params = [{transform_indices = @transform_0, window_bounds = array<i64: 1, 18, 72>}, {pipeline_mode = #tpu.pipeline_mode<synchronous>, transform_indices = @transform_1, window_bounds = array<i64: 3, 72, 512>}, {transform_indices = @transform_2, window_bounds = array<i64: 1, 16, 512>}, {transform_indices = @transform_3, window_bounds = array<i64: 1, 2, 512>}]} {
    %c16_i32 = arith.constant 16 : i32
    %0 = arith.muli %arg1, %c16_i32 : i32
    %1 = tpu.assume_multiple %0, 8 : i32
    %cst = arith.constant 0.000000e+00 : f32
    %2 = vector.broadcast %cst : f32 to vector<16x512xf32>
    %c0_i32 = arith.constant 0 : i32
    %3 = arith.addi %1, %c0_i32 : i32
    %c0 = arith.constant 0 : index
    %4 = arith.index_cast %3 : i32 to index
    %c0_0 = arith.constant 0 : index
    %5 = vector.load %arg2[%c0, %4, %c0_0] : memref<1x18x72xf32, #tpu.memory_space<vmem>>, vector<1x16x72xf32>
    %6 = vector.shape_cast %5 : vector<1x16x72xf32> to vector<16x72xf32>
    %c0_1 = arith.constant 0 : index
    %c0_2 = arith.constant 0 : index
    %c0_3 = arith.constant 0 : index
    %7 = vector.load %arg3[%c0_1, %c0_2, %c0_3] : memref<3x72x512xf32, #tpu.memory_space<vmem>>, vector<1x72x512xf32>
    %8 = vector.shape_cast %7 : vector<1x72x512xf32> to vector<72x512xf32>
    %cst_4 = arith.constant dense<0.000000e+00> : vector<16x512xf32>
    %9 = tpu.matmul %6, %8, %cst_4 {dimension_numbers = #tpu.dot_dimension_numbers<[1], [0], [0], [1], [0, 0, 1, 1], [], []>} : vector<16x72xf32>, vector<72x512xf32>, vector<16x512xf32> -> vector<16x512xf32>
    %10 = arith.addf %2, %9 : vector<16x512xf32>
    %c1_i32 = arith.constant 1 : i32
    %11 = arith.addi %1, %c1_i32 : i32
    %c0_5 = arith.constant 0 : index
    %12 = arith.index_cast %11 : i32 to index
    %c0_6 = arith.constant 0 : index
    %13 = vector.load %arg2[%c0_5, %12, %c0_6] : memref<1x18x72xf32, #tpu.memory_space<vmem>>, vector<1x16x72xf32>
    %14 = vector.shape_cast %13 : vector<1x16x72xf32> to vector<16x72xf32>
    %c1 = arith.constant 1 : index
    %c0_7 = arith.constant 0 : index
    %c0_8 = arith.constant 0 : index
    %15 = vector.load %arg3[%c1, %c0_7, %c0_8] : memref<3x72x512xf32, #tpu.memory_space<vmem>>, vector<1x72x512xf32>
    %16 = vector.shape_cast %15 : vector<1x72x512xf32> to vector<72x512xf32>
    %cst_9 = arith.constant dense<0.000000e+00> : vector<16x512xf32>
    %17 = tpu.matmul %14, %16, %cst_9 {dimension_numbers = #tpu.dot_dimension_numbers<[1], [0], [0], [1], [0, 0, 1, 1], [], []>} : vector<16x72xf32>, vector<72x512xf32>, vector<16x512xf32> -> vector<16x512xf32>
    %18 = arith.addf %10, %17 : vector<16x512xf32>
    %c2_i32 = arith.constant 2 : i32
    %19 = arith.addi %1, %c2_i32 : i32
    %c0_10 = arith.constant 0 : index
    %20 = arith.index_cast %19 : i32 to index
    %c0_11 = arith.constant 0 : index
    %21 = vector.load %arg2[%c0_10, %20, %c0_11] : memref<1x18x72xf32, #tpu.memory_space<vmem>>, vector<1x16x72xf32>
    %22 = vector.shape_cast %21 : vector<1x16x72xf32> to vector<16x72xf32>
    %c2 = arith.constant 2 : index
    %c0_12 = arith.constant 0 : index
    %c0_13 = arith.constant 0 : index
    %23 = vector.load %arg3[%c2, %c0_12, %c0_13] : memref<3x72x512xf32, #tpu.memory_space<vmem>>, vector<1x72x512xf32>
    %24 = vector.shape_cast %23 : vector<1x72x512xf32> to vector<72x512xf32>
    %cst_14 = arith.constant dense<0.000000e+00> : vector<16x512xf32>
    %25 = tpu.matmul %22, %24, %cst_14 {dimension_numbers = #tpu.dot_dimension_numbers<[1], [0], [0], [1], [0, 0, 1, 1], [], []>} : vector<16x72xf32>, vector<72x512xf32>, vector<16x512xf32> -> vector<16x512xf32>
    %26 = arith.addf %18, %25 : vector<16x512xf32>
    %c0_15 = arith.constant 0 : index
    %c0_16 = arith.constant 0 : index
    %c0_17 = arith.constant 0 : index
    %27 = vector.load %arg4[%c0_15, %c0_16, %c0_17] : memref<1x16x512xf32, #tpu.memory_space<vmem>>, vector<1x16x512xf32>
    %28 = vector.shape_cast %27 : vector<1x16x512xf32> to vector<16x512xf32>
    %29 = vector.shape_cast %26 : vector<16x512xf32> to vector<1x16x512xf32>
    tpu.vector_store %arg4[%c0_15, %c0_16, %c0_17], %29 {strides = array<i32>} : memref<1x16x512xf32, #tpu.memory_space<vmem>>, vector<1x16x512xf32>,
    %cst_18 = arith.constant dense<0.000000e+00> : vector<512xf32>
    %30 = vector.multi_reduction <add>, %26, %cst_18 [0] : vector<16x512xf32> to vector<512xf32>
    %31 = vector.shape_cast %30 : vector<512xf32> to vector<1x512xf32>
    %32 = arith.mulf %26, %26 : vector<16x512xf32>
    %cst_19 = arith.constant dense<0.000000e+00> : vector<512xf32>
    %33 = vector.multi_reduction <add>, %32, %cst_19 [0] : vector<16x512xf32> to vector<512xf32>
    %34 = vector.shape_cast %33 : vector<512xf32> to vector<1x512xf32>
    %35 = tpu.concatenate %31, %34 in 0 : vector<1x512xf32>, vector<1x512xf32> -> vector<2x512xf32>
    %c0_20 = arith.constant 0 : index
    %c0_21 = arith.constant 0 : index
    %c0_22 = arith.constant 0 : index
    %36 = vector.load %arg5[%c0_20, %c0_21, %c0_22] : memref<1x2x512xf32, #tpu.memory_space<vmem>>, vector<1x2x512xf32>
    %37 = vector.shape_cast %36 : vector<1x2x512xf32> to vector<2x512xf32>
    %38 = vector.shape_cast %35 : vector<2x512xf32> to vector<1x2x512xf32>
    tpu.vector_store %arg5[%c0_20, %c0_21, %c0_22], %38 {strides = array<i32>} : memref<1x2x512xf32, #tpu.memory_space<vmem>>, vector<1x2x512xf32>,
    return
  }
  func.func @transform_0(%arg0: i32, %arg1: i32) -> (i32, i32, i32) {
    %c0_i32 = arith.constant 0 : i32
    %c0_i32_0 = arith.constant 0 : i32
    %c0_i32_1 = arith.constant 0 : i32
    return %arg0, %c0_i32, %c0_i32_0 : i32, i32, i32
  }
  func.func @transform_1(%arg0: i32, %arg1: i32) -> (i32, i32, i32) {
    %c0_i32 = arith.constant 0 : i32
    %c0_i32_0 = arith.constant 0 : i32
    %c0_i32_1 = arith.constant 0 : i32
    %c0_i32_2 = arith.constant 0 : i32
    return %c0_i32, %c0_i32_0, %c0_i32_1 : i32, i32, i32
  }
  func.func @transform_2(%arg0: i32, %arg1: i32) -> (i32, i32, i32) {
    %c0_i32 = arith.constant 0 : i32
    %c0_i32_0 = arith.constant 0 : i32
    return %arg0, %arg1, %c0_i32 : i32, i32, i32
  }
  func.func @transform_3(%arg0: i32, %arg1: i32) -> (i32, i32, i32) {
    %c1_i32 = arith.constant 1 : i32
    %0 = arith.muli %arg0, %c1_i32 : i32
    %1 = arith.addi %0, %arg1 : i32
    %c0_i32 = arith.constant 0 : i32
    %c0_i32_0 = arith.constant 0 : i32
    %c0_i32_1 = arith.constant 0 : i32
    return %1, %c0_i32, %c0_i32_0 : i32, i32, i32
  }
}

</mosaic_0001>

<llo_original>
// kernel: upsample2_bloc.1
$region0: #{upsample2_bloc.1}
  #allocation0 [shape = 'u32[]', space=smem, size = 0x4, offset = 0x4, fixed_abs, tag = 'smem constant byte address 0x4 - core index']
  #allocation1 [shape = 'u32[144,128]{1,0:T(1,128)}', space=vmem, size = 0x12000, scoped, tag = 'internal scratch']
  %s0 = inlined_call_operand.vmem [shape: f32[2,18,72], index: 0, kind: input, shape index: {}]
  %s1 = inlined_call_operand.vmem [shape: f32[3,72,512], index: 1, kind: input, shape index: {}]
  %s2 = inlined_call_operand.vmem [shape: f32[2,16,512], index: 2, kind: output, shape index: {0}]
  %s3 = inlined_call_operand.vmem [shape: f32[2,2,512], index: 3, kind: output, shape index: {1}]
  %4 = xla_tuple %s2, %s3
  %s5 = sld [smem:[#allocation0]]
  $region49: #{upsample2_bloc.1} parent=0
    _
  %s7 = ssub.s32 1, %s5
  %s8 = scalar_select 0, %s7, %s5
  loop: start=0, step=1, limit=4
  $region2: #{upsample2_bloc.1} parent=0 // loop_pre_header
    _
  $region3: #{upsample2_bloc.1} parent=0 // loop_header
    %s10 = sphi 0, %s14
    %p11 = scmp.ge.s32.totalorder %s10, 4
    %s17 = sphi 0, %s29
    %s18 = sphi 0, %s25
    %s19 = sphi 0, %s17
    %s20 = sphi 0, %s18
    %s21 = sphi 0, %s19
    %s22 = sphi 0, %s20
    %s32 = sphi 0, %s34
    %s35 = sphi 0, %s32
    %s36 = sphi 0, %s35
    %s52 = sphi 0, %s36
    %s56 = sphi 0, %s56
    %s58 = sphi 0, %s56
    %s59 = sphi 0, %s58
    %s73 = sphi 0, %s59
    %s81 = sphi 0, %s83
    %s84 = sphi 0, %s81
    %s85 = sphi 0, %s84
    %s101 = sphi 0, %s85
    %s109 = sphi 0, %s111
    %s112 = sphi 0, %s109
    %s113 = sphi 0, %s112
    %s129 = sphi 0, %s113
  $region4: #{upsample2_bloc.1} parent=0 // loop_header_branch
    %13 = sbr.rel (%p11) target = $region8
  $region5: #{upsample2_bloc.1} parent=0 // loop_body
    %s15 = ssub.s32 %s10, 1
    %s16 = ssub.s32 %s10, 2
    %s23 = sadd.s32 1, %s18
    %p24 = scmp.ge.s32.totalorder %s23, 1
    %s25 = scalar_select %p24, 0, %s23
    %s26 = sadd.s32 1, %s17
    %s27 = scalar_select %p24, %s26, %s17
    %p28 = scmp.ge.s32.totalorder %s27, 2
    %s29 = scalar_select %p28, 0, %s27
    %s30 = ssub.s32 %s17, %s29
    %p31 = scmp.eq.s32.totalorder %s30, 0
    %s33 = sadd.s32 %s32, 1
    %s34 = scalar_select %p31, %s32, %s33
    %p37 = pneg %p31
    %p38 = scmp.eq.s32.totalorder %s10, 1
    %p39 = por %p37, %p38
    %p40 = scmp.ne.s32.totalorder %s32, %s35
    %p41 = scmp.eq.s32.totalorder %s10, 0
    %p42 = por %p40, %p41
    %p43 = scmp.ne.s32.totalorder %s32, %s35
    %p44 = scmp.eq.s32.totalorder %s15, 1
    %p45 = por %p43, %p44
    %p46 = scmp.ne.s32.totalorder %s35, %s36
    %p47 = scmp.eq.s32.totalorder %s15, 0
    %p48 = por %p46, %p47
    %p49 = scmp.ne.s32.totalorder %s35, %s36
    %p50 = scmp.eq.s32.totalorder %s16, 1
    %p51 = por %p49, %p50
    %p53 = scmp.ne.s32.totalorder %s36, %s52
    %p54 = scmp.eq.s32.totalorder %s16, 0
    %p55 = por %p53, %p54
    %s57 = sadd.s32 %s56, 1
    %p60 = scmp.eq.s32.totalorder %s10, 1
    %p61 = scmp.ne.s32.totalorder %s56, %s58
    %p62 = scmp.eq.s32.totalorder %s10, 0
    %p63 = por %p61, %p62
    %p64 = scmp.ne.s32.totalorder %s56, %s58
    %p65 = scmp.eq.s32.totalorder %s15, 1
    %p66 = por %p64, %p65
    %p67 = scmp.ne.s32.totalorder %s58, %s59
    %p68 = scmp.eq.s32.totalorder %s15, 0
    %p69 = por %p67, %p68
    %p70 = scmp.ne.s32.totalorder %s58, %s59
    %p71 = scmp.eq.s32.totalorder %s16, 1
    %p72 = por %p70, %p71
    %p74 = scmp.ne.s32.totalorder %s59, %s73
    %p75 = scmp.eq.s32.totalorder %s16, 0
    %p76 = por %p74, %p75
    %s77 = ssub.s32 %s17, %s29
    %s78 = ssub.s32 %s18, %s25
    %s79 = sor.u32 %s77, %s78
    %p80 = scmp.eq.s32.totalorder %s79, 0
    %s82 = sadd.s32 %s81, 1
    %s83 = scalar_select %p80, %s81, %s82
    %p86 = pneg %p80
    %p87 = scmp.eq.s32.totalorder %s10, 1
    %p88 = por %p86, %p87
    %p89 = scmp.ne.s32.totalorder %s81, %s84
    %p90 = scmp.eq.s32.totalorder %s10, 0
    %p91 = por %p89, %p90
    %p92 = scmp.ne.s32.totalorder %s81, %s84
    %p93 = scmp.eq.s32.totalorder %s15, 1
    %p94 = por %p92, %p93
    %p95 = scmp.ne.s32.totalorder %s84, %s85
    %p96 = scmp.eq.s32.totalorder %s15, 0
    %p97 = por %p95, %p96
    %p98 = scmp.ne.s32.totalorder %s84, %s85
    %p99 = scmp.eq.s32.totalorder %s16, 1
    %p100 = por %p98, %p99
    %p102 = scmp.ne.s32.totalorder %s85, %s101
    %p103 = scmp.eq.s32.totalorder %s16, 0
    %p104 = por %p102, %p103
    %s105 = sadd.s32 %s17, %s18
    %s106 = sadd.s32 %s29, %s25
    %s107 = ssub.s32 %s105, %s106
    %p108 = scmp.eq.s32.totalorder %s107, 0
    %s110 = sadd.s32 %s109, 1
    %s111 = scalar_select %p108, %s109, %s110
    %p114 = pneg %p108
    %p115 = scmp.eq.s32.totalorder %s10, 1
    %p116 = por %p114, %p115
    %p117 = scmp.ne.s32.totalorder %s109, %s112
    %p118 = scmp.eq.s32.totalorder %s10, 0
    %p119 = por %p117, %p118
    %p120 = scmp.ne.s32.totalorder %s109, %s112
    %p121 = scmp.eq.s32.totalorder %s15, 1
    %p122 = por %p120, %p121
    %p123 = scmp.ne.s32.totalorder %s112, %s113
    %p124 = scmp.eq.s32.totalorder %s15, 0
    %p125 = por %p123, %p124
    %p126 = scmp.ne.s32.totalorder %s112, %s113
    %p127 = scmp.eq.s32.totalorder %s16, 1
    %p128 = por %p126, %p127
    %p130 = scmp.ne.s32.totalorder %s113, %s129
    %p131 = scmp.eq.s32.totalorder %s16, 0
    %p132 = por %p130, %p131
    %p133 = scmp.le.s32.totalorder 1, %s10
    %p134 = scmp.lt.s32.totalorder %s10, 3
    %p135 = pnand %p133, %p134
    %p136 = pneg %p135
    // Predicated region
    $region9: #{upsample2_bloc.1} parent=5 // pred_check
      _
    $region10: #{upsample2_bloc.1} parent=5 // pred_check_branch
      %138 = sbr.rel (%p135) target = $region12
    $region11: #{upsample2_bloc.1} parent=5 // pred_region
      %s139 = ssub.s32 %s10, 1
      // Predicated region
      $region13: #{upsample2_bloc.1} parent=11 // pred_check
        %p140 = pneg %p69
      $region14: #{upsample2_bloc.1} parent=11 // pred_check_branch
        %142 = sbr.rel (%p140) target = $region16
      $region15: #{upsample2_bloc.1} parent=11 // pred_region
        _
      $region16: #{upsample2_bloc.1} parent=11 // pred_fallthru
        _
    $region12: #{upsample2_bloc.1} parent=5 // pred_fallthru
      _
    %p143 = scmp.lt.s32.totalorder %s10, 2
    // Predicated region
    $region17: #{upsample2_bloc.1} parent=5 // pred_check
      %p144 = pneg %p143
    $region18: #{upsample2_bloc.1} parent=5 // pred_check_branch
      %146 = sbr.rel (%p144) target = $region20
    $region19: #{upsample2_bloc.1} parent=5 // pred_region
      // Predicated region
      $region21: #{upsample2_bloc.1} parent=19 // pred_check
        %p147 = pneg %p42
      $region22: #{upsample2_bloc.1} parent=19 // pred_check_branch
        %149 = sbr.rel (%p147) target = $region24
      $region23: #{upsample2_bloc.1} parent=19 // pred_region
        %p150 = scmp.lt.s32.totalorder %s17, 1
        %s151 = scalar_select %p150, %s17, 1
        %s152 = smul.addr %s151, 3
        %s153 = smul.addr %s152, 8
        %s154 = scalar_lea.vmem %s0, %s153
      $region24: #{upsample2_bloc.1} parent=19 // pred_fallthru
        _
    $region20: #{upsample2_bloc.1} parent=5 // pred_fallthru
      _
    %p155 = scmp.le.s32.totalorder 1, %s10
    %p156 = scmp.lt.s32.totalorder %s10, 3
    %p157 = pnand %p155, %p156
    %p158 = pneg %p157
    // Predicated region
    $region25: #{upsample2_bloc.1} parent=5 // pred_check
      _
    $region26: #{upsample2_bloc.1} parent=5 // pred_check_branch
      %160 = sbr.rel (%p157) target = $region28
    $region27: #{upsample2_bloc.1} parent=5 // pred_region
      %s161 = ssub.s32 %s10, 1
      %p162 = scmp.lt.s32.totalorder %s19, 1
      %s163 = scalar_select %p162, %s19, 1
      %s164 = smul.addr %s163, 3
      %s165 = smul.addr %s164, 8
      %s166 = scalar_lea.vmem %s0, %s165
      %p167 = pneg %p48
      %p168 = pneg %p45
      %p169 = pneg %p69
      %p170 = pneg %p66
      %p171 = pneg %p97
      %p172 = pneg %p94
      %s173 = smul.u32 2, %s20
      %p174 = scmp.lt.s32.totalorder %s19, 1
      %s175 = scalar_select %p174, %s19, 1
      %p176 = scmp.lt.s32.totalorder %s173, 1
      %s177 = scalar_select %p176, %s173, 1
      %s178 = smul.addr %s177, 4
      %s179 = smul.addr %s175, 8
      %s180 = sadd.s32 %s178, %s179
      %s181 = smul.addr %s180, 8
      %s182 = scalar_lea.vmem %s2, %s181
      %p183 = pneg %p125
      %p184 = pneg %p122
      %s185 = sadd.s32 %s19, %s20
      %p186 = scmp.lt.s32.totalorder %s185, 1
      %s187 = scalar_select %p186, %s185, 1
      %s188 = smul.addr %s187, 4
      %s189 = smul.addr %s188, 2
      %s190 = scalar_lea.vmem %s3, %s189
      %p191 = scmp.lt.s32.totalorder %s19, 1
      %s192 = scalar_select %p191, %s19, 1
      %s193 = smul.addr %s192, 3
      %s194 = smul.addr %s193, 8
      %s195 = scalar_lea.vmem %s0, %s194
      %s196 = smul.u32 2, %s20
      %p197 = scmp.lt.s32.totalorder %s19, 1
      %s198 = scalar_select %p197, %s19, 1
      %p199 = scmp.lt.s32.totalorder %s196, 1
      %s200 = scalar_select %p199, %s196, 1
      %s201 = smul.addr %s200, 4
      %s202 = smul.addr %s198, 8
      %s203 = sadd.s32 %s201, %s202
      %s204 = smul.addr %s203, 8
      %s205 = scalar_lea.vmem %s2, %s204
      %s206 = smul.u32 2, %s20
      %s207 = sadd.s32 %s19, %s20
      %p208 = scmp.lt.s32.totalorder %s207, 1
      %s209 = scalar_select %p208, %s207, 1
      %s210 = smul.addr %s209, 4
      %s211 = smul.addr %s210, 2
      %s212 = scalar_lea.vmem %s3, %s211
      %s213 = sadd.s32 %s19, %s20
      %s214 = smul.u32 %s20, 16
      %s215 = scalar_lea.vmem %s195, %s214
      %v216 = vld [vmem:[%s215] sm:$0xff]
      %v217 = vld [vmem:[%s215 + $0x8] sm:$0xff]
      %v218 = vld [vmem:[%s1] sm:$0xff]
      %v219 = vld [vmem:[%s1 + $0x8] sm:$0xff]
      %v220 = vld [vmem:[%s1 + $0x10] sm:$0xff]
      %v221 = vld [vmem:[%s1 + $0x18] sm:$0xff]
      %v222 = vld [vmem:[%s1 + $0x20] sm:$0xff]
      %v223 = vld [vmem:[%s1 + $0x28] sm:$0xff]
      %v224 = vld [vmem:[%s1 + $0x30] sm:$0xff]
      %v225 = vld [vmem:[%s1 + $0x38] sm:$0xff]
      %v226 = vld [vmem:[%s1 + $0x40] sm:$0xff]
      %v227 = vld [vmem:[%s1 + $0x48] sm:$0xff]
      %v228 = vld [vmem:[%s1 + $0x50] sm:$0xff]
      %v229 = vld [vmem:[%s1 + $0x58] sm:$0xff]
      %v230 = vld [vmem:[%s1 + $0x60] sm:$0xff]
      %v231 = vld [vmem:[%s1 + $0x68] sm:$0xff]
      %v232 = vld [vmem:[%s1 + $0x70] sm:$0xff]
      %v233 = vld [vmem:[%s1 + $0x78] sm:$0xff]
      %v234 = vld [vmem:[%s1 + $0x80] sm:$0xff]
      %v235 = vld [vmem:[%s1 + $0x88] sm:$0xff]
      %v236 = vld [vmem:[%s1 + $0x90] sm:$0xff]
      %v237 = vld [vmem:[%s1 + $0x98] sm:$0xff]
      %v238 = vld [vmem:[%s1 + $0xa0] sm:$0xff]
      %v239 = vld [vmem:[%s1 + $0xa8] sm:$0xff]
      %v240 = vld [vmem:[%s1 + $0xb0] sm:$0xff]
      %v241 = vld [vmem:[%s1 + $0xb8] sm:$0xff]
      %v242 = vld [vmem:[%s1 + $0xc0] sm:$0xff]
      %v243 = vld [vmem:[%s1 + $0xc8] sm:$0xff]
      %v244 = vld [vmem:[%s1 + $0xd0] sm:$0xff]
      %v245 = vld [vmem:[%s1 + $0xd8] sm:$0xff]
      %v246 = vld [vmem:[%s1 + $0xe0] sm:$0xff]
      %v247 = vld [vmem:[%s1 + $0xe8] sm:$0xff]
      %v248 = vld [vmem:[%s1 + $0xf0] sm:$0xff]
      %v249 = vld [vmem:[%s1 + $0xf8] sm:$0xff]
      %v250 = vld [vmem:[%s1 + $0x100] sm:$0xff]
      %v251 = vld [vmem:[%s1 + $0x108] sm:$0xff]
      %v252 = vld [vmem:[%s1 + $0x110] sm:$0xff]
      %v253 = vld [vmem:[%s1 + $0x118] sm:$0xff]
      %s254 = sadd.s32 %s214, 1
      %s255 = scalar_lea.vmem %s195, %s254
      %v256 = vld [vmem:[%s255] sm:$0xff]
      %v257 = vld [vmem:[%s255 + $0x8] sm:$0xff]
      %s258 = scalar_lea.vmem %s1, 288
      %v259 = vld [vmem:[%s258] sm:$0xff]
      %v260 = vld [vmem:[%s258 + $0x8] sm:$0xff]
      %v261 = vld [vmem:[%s258 + $0x10] sm:$0xff]
      %v262 = vld [vmem:[%s258 + $0x18] sm:$0xff]
      %v263 = vld [vmem:[%s258 + $0x20] sm:$0xff]
      %v264 = vld [vmem:[%s258 + $0x28] sm:$0xff]
      %v265 = vld [vmem:[%s258 + $0x30] sm:$0xff]
      %v266 = vld [vmem:[%s258 + $0x38] sm:$0xff]
      %v267 = vld [vmem:[%s258 + $0x40] sm:$0xff]
      %v268 = vld [vmem:[%s258 + $0x48] sm:$0xff]
      %v269 = vld [vmem:[%s258 + $0x50] sm:$0xff]
      %v270 = vld [vmem:[%s258 + $0x58] sm:$0xff]
      %v271 = vld [vmem:[%s258 + $0x60] sm:$0xff]
      %v272 = vld [vmem:[%s258 + $0x68] sm:$0xff]
      %v273 = vld [vmem:[%s258 + $0x70] sm:$0xff]
      %v274 = vld [vmem:[%s258 + $0x78] sm:$0xff]
      %v275 = vld [vmem:[%s258 + $0x80] sm:$0xff]
      %v276 = vld [vmem:[%s258 + $0x88] sm:$0xff]
      %v277 = vld [vmem:[%s258 + $0x90] sm:$0xff]
      %v278 = vld [vmem:[%s258 + $0x98] sm:$0xff]
      %v279 = vld [vmem:[%s258 + $0xa0] sm:$0xff]
      %v280 = vld [vmem:[%s258 + $0xa8] sm:$0xff]
      %v281 = vld [vmem:[%s258 + $0xb0] sm:$0xff]
      %v282 = vld [vmem:[%s258 + $0xb8] sm:$0xff]
      %v283 = vld [vmem:[%s258 + $0xc0] sm:$0xff]
      %v284 = vld [vmem:[%s258 + $0xc8] sm:$0xff]
      %v285 = vld [vmem:[%s258 + $0xd0] sm:$0xff]
      %v286 = vld [vmem:[%s258 + $0xd8] sm:$0xff]
      %v287 = vld [vmem:[%s258 + $0xe0] sm:$0xff]
      %v288 = vld [vmem:[%s258 + $0xe8] sm:$0xff]
      %v289 = vld [vmem:[%s258 + $0xf0] sm:$0xff]
      %v290 = vld [vmem:[%s258 + $0xf8] sm:$0xff]
      %v291 = vld [vmem:[%s258 + $0x100] sm:$0xff]
      %v292 = vld [vmem:[%s258 + $0x108] sm:$0xff]
      %v293 = vld [vmem:[%s258 + $0x110] sm:$0xff]
      %v294 = vld [vmem:[%s258 + $0x118] sm:$0xff]
      %vm295 = vcmask 588800
      %v297 = vsel %vm295, %v256, 0
      %v300 = vsel %vm295, %v257, 0
      %302 = vmatprep.subr.mxu0 0.0
      %303 = vmatpush1.msra.mxu0 0.0
      %304 = vmatprep.subr.mxu0 0.0
      %305 = vmatpush1.msra.mxu0 0.0
      %306 = vmatprep.subr.mxu0 0.0
      %307 = vmatpush1.msra.mxu0 0.0
      %308 = vmatprep.subr.mxu0 0.0
      %309 = vmatpush1.msra.mxu0 0.0
      %310 = vmatprep.subr.mxu0 0.0
      %311 = vmatpush1.msra.mxu0 0.0
      %312 = vmatprep.subr.mxu0 0.0
      %313 = vmatpush1.msra.mxu0 0.0
      %314 = vmatprep.subr.mxu0 0.0
      %315 = vmatpush1.msra.mxu0 0.0
      %316 = vmatprep.subr.mxu0 %v292
      %317 = vmatpush1.msra.mxu0 %v291
      %318 = vmatprep.subr.mxu0 %v288
      %319 = vmatpush1.msra.mxu0 %v287
      %320 = vmatprep.subr.mxu0 %v284
      %321 = vmatpush1.msra.mxu0 %v283
      %322 = vmatprep.subr.mxu0 %v280
      %323 = vmatpush1.msra.mxu0 %v279
      %324 = vmatprep.subr.mxu0 %v276
      %325 = vmatpush1.msra.mxu0 %v275
      %326 = vmatprep.subr.mxu0 %v272
      %327 = vmatpush1.msra.mxu0 %v271
      %328 = vmatprep.subr.mxu0 %v268
      %329 = vmatpush1.msra.mxu0 %v267
      %330 = vmatprep.subr.mxu0 %v264
      %331 = vmatpush1.msra.mxu0 %v263
      %332 = vmatprep.subr.mxu0 %v260
      %333 = vmatpush1.msra.mxu0 %v259
      %334 = vmatprep.subr.mxu0 0.0
      %335 = vmatpush2.msra.mxu0 0.0
      %336 = vmatprep.subr.mxu0 0.0
      %337 = vmatpush2.msra.mxu0 0.0
      %338 = vmatprep.subr.mxu0 0.0
      %339 = vmatpush2.msra.mxu0 0.0
      %340 = vmatprep.subr.mxu0 0.0
      %341 = vmatpush2.msra.mxu0 0.0
      %342 = vmatprep.subr.mxu0 0.0
      %343 = vmatpush2.msra.mxu0 0.0
      %344 = vmatprep.subr.mxu0 0.0
      %345 = vmatpush2.msra.mxu0 0.0
      %346 = vmatprep.subr.mxu0 0.0
      %347 = vmatpush2.msra.mxu0 0.0
      %348 = vmatprep.subr.mxu0 0.0
      %349 = vmatpush2.msra.mxu0 0.0
      %350 = vmatprep.subr.mxu0 0.0
      %351 = vmatpush2.msra.mxu0 0.0
      %352 = vmatprep.subr.mxu0 0.0
      %353 = vmatpush2.msra.mxu0 0.0
      %354 = vmatprep.subr.mxu0 0.0
      %355 = vmatpush2.msra.mxu0 0.0
      %356 = vmatprep.subr.mxu0 0.0
      %357 = vmatpush2.msra.mxu0 0.0
      %358 = vmatprep.subr.mxu0 0.0
      %359 = vmatpush2.msra.mxu0 0.0
      %360 = vmatprep.subr.mxu0 0.0
      %361 = vmatpush2.msra.mxu0 0.0
      %362 = vmatprep.subr.mxu0 0.0
      %363 = vmatpush2.msra.mxu0 0.0
      %364 = vmatprep.subr.mxu0 0.0
      %365 = vmatpush2.msra.mxu0 0.0
      %366 = vmatprep.mubr.f32.mxu0 0.0
      %367 = vmatmul.mubr.f32.gmra.mxu0 %v297
      %v368 = vpop.f32.mrf.mxu0
      %v369 = vadd.f32 0.0, %v368
      %v370 = vpop.f32.mrf.mxu0
      %v371 = vadd.f32 0.0, %v370
      %372 = vmatprep.mubr.f32.mxu0 0.0
      %373 = vmatmul.mubr.f32.gmra.mxu0 %v300
      %v374 = vpop.f32.mrf.mxu0
      %v375 = vadd.f32 0.0, %v374
      %v376 = vpop.f32.mrf.mxu0
      %v377 = vadd.f32 0.0, %v376
      %378 = vdwg.mxu0
      %379 = vmatprep.subr.mxu0 0.0
      %380 = vmatpush1.msra.mxu0 0.0
      %381 = vmatprep.subr.mxu0 0.0
      %382 = vmatpush1.msra.mxu0 0.0
      %383 = vmatprep.subr.mxu0 0.0
      %384 = vmatpush1.msra.mxu0 0.0
      %385 = vmatprep.subr.mxu0 0.0
      %386 = vmatpush1.msra.mxu0 0.0
      %387 = vmatprep.subr.mxu0 0.0
      %388 = vmatpush1.msra.mxu0 0.0
      %389 = vmatprep.subr.mxu0 0.0
      %390 = vmatpush1.msra.mxu0 0.0
      %391 = vmatprep.subr.mxu0 0.0
      %392 = vmatpush1.msra.mxu0 0.0
      %393 = vmatprep.subr.mxu0 %v294
      %394 = vmatpush1.msra.mxu0 %v293
      %395 = vmatprep.subr.mxu0 %v290
      %396 = vmatpush1.msra.mxu0 %v289
      %397 = vmatprep.subr.mxu0 %v286
      %398 = vmatpush1.msra.mxu0 %v285
      %399 = vmatprep.subr.mxu0 %v282
      %400 = vmatpush1.msra.mxu0 %v281
      %401 = vmatprep.subr.mxu0 %v278
      %402 = vmatpush1.msra.mxu0 %v277
      %403 = vmatprep.subr.mxu0 %v274
      %404 = vmatpush1.msra.mxu0 %v273
      %405 = vmatprep.subr.mxu0 %v270
      %406 = vmatpush1.msra.mxu0 %v269
      %407 = vmatprep.subr.mxu0 %v266
      %408 = vmatpush1.msra.mxu0 %v265
      %409 = vmatprep.subr.mxu0 %v262
      %410 = vmatpush1.msra.mxu0 %v261
      %411 = vmatprep.subr.mxu0 0.0
      %412 = vmatpush2.msra.mxu0 0.0
      %413 = vmatprep.subr.mxu0 0.0
      %414 = vmatpush2.msra.mxu0 0.0
      %415 = vmatprep.subr.mxu0 0.0
      %416 = vmatpush2.msra.mxu0 0.0
      %417 = vmatprep.subr.mxu0 0.0
      %418 = vmatpush2.msra.mxu0 0.0
      %419 = vmatprep.subr.mxu0 0.0
      %420 = vmatpush2.msra.mxu0 0.0
      %421 = vmatprep.subr.mxu0 0.0
      %422 = vmatpush2.msra.mxu0 0.0
      %423 = vmatprep.subr.mxu0 0.0
      %424 = vmatpush2.msra.mxu0 0.0
      %425 = vmatprep.subr.mxu0 0.0
      %426 = vmatpush2.msra.mxu0 0.0
      %427 = vmatprep.subr.mxu0 0.0
      %428 = vmatpush2.msra.mxu0 0.0
      %429 = vmatprep.subr.mxu0 0.0
      %430 = vmatpush2.msra.mxu0 0.0
      %431 = vmatprep.subr.mxu0 0.0
      %432 = vmatpush2.msra.mxu0 0.0
      %433 = vmatprep.subr.mxu0 0.0
      %434 = vmatpush2.msra.mxu0 0.0
      %435 = vmatprep.subr.mxu0 0.0
      %436 = vmatpush2.msra.mxu0 0.0
      %437 = vmatprep.subr.mxu0 0.0
      %438 = vmatpush2.msra.mxu0 0.0
      %439 = vmatprep.subr.mxu0 0.0
      %440 = vmatpush2.msra.mxu0 0.0
      %441 = vmatprep.subr.mxu0 0.0
      %442 = vmatpush2.msra.mxu0 0.0
      %443 = vmatprep.mubr.f32.mxu0 0.0
      %444 = vmatmul.mubr.f32.gmra.mxu0 %v297
      %v445 = vpop.f32.mrf.mxu0
      %v446 = vadd.f32 0.0, %v445
      %v447 = vpop.f32.mrf.mxu0
      %v448 = vadd.f32 0.0, %v447
      %449 = vmatprep.mubr.f32.mxu0 0.0
      %450 = vmatmul.mubr.f32.gmra.mxu0 %v300
      %v451 = vpop.f32.mrf.mxu0
      %v452 = vadd.f32 0.0, %v451
      %v453 = vpop.f32.mrf.mxu0
      %v454 = vadd.f32 0.0, %v453
      %455 = vdwg.mxu0
      %v457 = vsel %vm295, %v216, 0
      %v460 = vsel %vm295, %v217, 0
      %462 = vmatprep.subr.mxu0 0.0
      %463 = vmatpush1.msra.mxu0 0.0
      %464 = vmatprep.subr.mxu0 0.0
      %465 = vmatpush1.msra.mxu0 0.0
      %466 = vmatprep.subr.mxu0 0.0
      %467 = vmatpush1.msra.mxu0 0.0
      %468 = vmatprep.subr.mxu0 0.0
      %469 = vmatpush1.msra.mxu0 0.0
      %470 = vmatprep.subr.mxu0 0.0
      %471 = vmatpush1.msra.mxu0 0.0
      %472 = vmatprep.subr.mxu0 0.0
      %473 = vmatpush1.msra.mxu0 0.0
      %474 = vmatprep.subr.mxu0 0.0
      %475 = vmatpush1.msra.mxu0 0.0
      %476 = vmatprep.subr.mxu0 %v251
      %477 = vmatpush1.msra.mxu0 %v250
      %478 = vmatprep.subr.mxu0 %v247
      %479 = vmatpush1.msra.mxu0 %v246
      %480 = vmatprep.subr.mxu0 %v243
      %481 = vmatpush1.msra.mxu0 %v242
      %482 = vmatprep.subr.mxu0 %v239
      %483 = vmatpush1.msra.mxu0 %v238
      %484 = vmatprep.subr.mxu0 %v235
      %485 = vmatpush1.msra.mxu0 %v234
      %486 = vmatprep.subr.mxu0 %v231
      %487 = vmatpush1.msra.mxu0 %v230
      %488 = vmatprep.subr.mxu0 %v227
      %489 = vmatpush1.msra.mxu0 %v226
      %490 = vmatprep.subr.mxu0 %v223
      %491 = vmatpush1.msra.mxu0 %v222
      %492 = vmatprep.subr.mxu0 %v219
      %493 = vmatpush1.msra.mxu0 %v218
      %494 = vmatprep.subr.mxu0 0.0
      %495 = vmatpush2.msra.mxu0 0.0
      %496 = vmatprep.subr.mxu0 0.0
      %497 = vmatpush2.msra.mxu0 0.0
      %498 = vmatprep.subr.mxu0 0.0
      %499 = vmatpush2.msra.mxu0 0.0
      %500 = vmatprep.subr.mxu0 0.0
      %501 = vmatpush2.msra.mxu0 0.0
      %502 = vmatprep.subr.mxu0 0.0
      %503 = vmatpush2.msra.mxu0 0.0
      %504 = vmatprep.subr.mxu0 0.0
      %505 = vmatpush2.msra.mxu0 0.0
      %506 = vmatprep.subr.mxu0 0.0
      %507 = vmatpush2.msra.mxu0 0.0
      %508 = vmatprep.subr.mxu0 0.0
      %509 = vmatpush2.msra.mxu0 0.0
      %510 = vmatprep.subr.mxu0 0.0
      %511 = vmatpush2.msra.mxu0 0.0
      %512 = vmatprep.subr.mxu0 0.0
      %513 = vmatpush2.msra.mxu0 0.0
      %514 = vmatprep.subr.mxu0 0.0
      %515 = vmatpush2.msra.mxu0 0.0
      %516 = vmatprep.subr.mxu0 0.0
      %517 = vmatpush2.msra.mxu0 0.0
      %518 = vmatprep.subr.mxu0 0.0
      %519 = vmatpush2.msra.mxu0 0.0
      %520 = vmatprep.subr.mxu0 0.0
      %521 = vmatpush2.msra.mxu0 0.0
      %522 = vmatprep.subr.mxu0 0.0
      %523 = vmatpush2.msra.mxu0 0.0
      %524 = vmatprep.subr.mxu0 0.0
      %525 = vmatpush2.msra.mxu0 0.0
      %526 = vmatprep.mubr.f32.mxu0 0.0
      %527 = vmatmul.mubr.f32.gmra.mxu0 %v457
      %v528 = vpop.f32.mrf.mxu0
      %v529 = vadd.f32 %v369, %v528
      %v530 = vpop.f32.mrf.mxu0
      %v531 = vadd.f32 %v371, %v530
      %532 = vmatprep.mubr.f32.mxu0 0.0
      %533 = vmatmul.mubr.f32.gmra.mxu0 %v460
      %v534 = vpop.f32.mrf.mxu0
      %v535 = vadd.f32 %v375, %v534
      %v536 = vpop.f32.mrf.mxu0
      %v537 = vadd.f32 %v377, %v536
      %538 = vdwg.mxu0
      %539 = vmatprep.subr.mxu0 0.0
      %540 = vmatpush1.msra.mxu0 0.0
      %541 = vmatprep.subr.mxu0 0.0
      %542 = vmatpush1.msra.mxu0 0.0
      %543 = vmatprep.subr.mxu0 0.0
      %544 = vmatpush1.msra.mxu0 0.0
      %545 = vmatprep.subr.mxu0 0.0
      %546 = vmatpush1.msra.mxu0 0.0
      %547 = vmatprep.subr.mxu0 0.0
      %548 = vmatpush1.msra.mxu0 0.0
      %549 = vmatprep.subr.mxu0 0.0
      %550 = vmatpush1.msra.mxu0 0.0
      %551 = vmatprep.subr.mxu0 0.0
      %552 = vmatpush1.msra.mxu0 0.0
      %553 = vmatprep.subr.mxu0 %v253
      %554 = vmatpush1.msra.mxu0 %v252
      %555 = vmatprep.subr.mxu0 %v249
      %556 = vmatpush1.msra.mxu0 %v248
      %557 = vmatprep.subr.mxu0 %v245
      %558 = vmatpush1.msra.mxu0 %v244
      %559 = vmatprep.subr.mxu0 %v241
      %560 = vmatpush1.msra.mxu0 %v240
      %561 = vmatprep.subr.mxu0 %v237
      %562 = vmatpush1.msra.mxu0 %v236
      %563 = vmatprep.subr.mxu0 %v233
      %564 = vmatpush1.msra.mxu0 %v232
      %565 = vmatprep.subr.mxu0 %v229
      %566 = vmatpush1.msra.mxu0 %v228
      %567 = vmatprep.subr.mxu0 %v225
      %568 = vmatpush1.msra.mxu0 %v224
      %569 = vmatprep.subr.mxu0 %v221
      %570 = vmatpush1.msra.mxu0 %v220
      %571 = vmatprep.subr.mxu0 0.0
      %572 = vmatpush2.msra.mxu0 0.0
      %573 = vmatprep.subr.mxu0 0.0
      %574 = vmatpush2.msra.mxu0 0.0
      %575 = vmatprep.subr.mxu0 0.0
      %576 = vmatpush2.msra.mxu0 0.0
      %577 = vmatprep.subr.mxu0 0.0
      %578 = vmatpush2.msra.mxu0 0.0
      %579 = vmatprep.subr.mxu0 0.0
      %580 = vmatpush2.msra.mxu0 0.0
      %581 = vmatprep.subr.mxu0 0.0
      %582 = vmatpush2.msra.mxu0 0.0
      %583 = vmatprep.subr.mxu0 0.0
      %584 = vmatpush2.msra.mxu0 0.0
      %585 = vmatprep.subr.mxu0 0.0
      %586 = vmatpush2.msra.mxu0 0.0
      %587 = vmatprep.subr.mxu0 0.0
      %588 = vmatpush2.msra.mxu0 0.0
      %589 = vmatprep.subr.mxu0 0.0
      %590 = vmatpush2.msra.mxu0 0.0
      %591 = vmatprep.subr.mxu0 0.0
      %592 = vmatpush2.msra.mxu0 0.0
      %593 = vmatprep.subr.mxu0 0.0
      %594 = vmatpush2.msra.mxu0 0.0
      %595 = vmatprep.subr.mxu0 0.0
      %596 = vmatpush2.msra.mxu0 0.0
      %597 = vmatprep.subr.mxu0 0.0
      %598 = vmatpush2.msra.mxu0 0.0
      %599 = vmatprep.subr.mxu0 0.0
      %600 = vmatpush2.msra.mxu0 0.0
      %601 = vmatprep.subr.mxu0 0.0
      %602 = vmatpush2.msra.mxu0 0.0
      %603 = vmatprep.mubr.f32.mxu0 0.0
      %604 = vmatmul.mubr.f32.gmra.mxu0 %v457
      %v605 = vpop.f32.mrf.mxu0
      %v606 = vadd.f32 %v446, %v605
      %v607 = vpop.f32.mrf.mxu0
      %v608 = vadd.f32 %v448, %v607
      %609 = vmatprep.mubr.f32.mxu0 0.0
      %610 = vmatmul.mubr.f32.gmra.mxu0 %v460
      %v611 = vpop.f32.mrf.mxu0
      %v612 = vadd.f32 %v452, %v611
      %v613 = vpop.f32.mrf.mxu0
      %v614 = vadd.f32 %v454, %v613
      %615 = vdwg.mxu0
      %s616 = sadd.s32 %s214, 2
      %s617 = scalar_lea.vmem %s195, %s616
      %v618 = vld [vmem:[%s617] sm:$0xff]
      %v619 = vld [vmem:[%s617 + $0x8] sm:$0xff]
      %s620 = scalar_lea.vmem %s1, 576
      %v621 = vld [vmem:[%s620] sm:$0xff]
      %v622 = vld [vmem:[%s620 + $0x8] sm:$0xff]
      %v623 = vld [vmem:[%s620 + $0x10] sm:$0xff]
      %v624 = vld [vmem:[%s620 + $0x18] sm:$0xff]
      %v625 = vld [vmem:[%s620 + $0x20] sm:$0xff]
      %v626 = vld [vmem:[%s620 + $0x28] sm:$0xff]
      %v627 = vld [vmem:[%s620 + $0x30] sm:$0xff]
      %v628 = vld [vmem:[%s620 + $0x38] sm:$0xff]
      %v629 = vld [vmem:[%s620 + $0x40] sm:$0xff]
      %v630 = vld [vmem:[%s620 + $0x48] sm:$0xff]
      %v631 = vld [vmem:[%s620 + $0x50] sm:$0xff]
      %v632 = vld [vmem:[%s620 + $0x58] sm:$0xff]
      %v633 = vld [vmem:[%s620 + $0x60] sm:$0xff]
      %v634 = vld [vmem:[%s620 + $0x68] sm:$0xff]
      %v635 = vld [vmem:[%s620 + $0x70] sm:$0xff]
      %v636 = vld [vmem:[%s620 + $0x78] sm:$0xff]
      %v637 = vld [vmem:[%s620 + $0x80] sm:$0xff]
      %v638 = vld [vmem:[%s620 + $0x88] sm:$0xff]
      %v639 = vld [vmem:[%s620 + $0x90] sm:$0xff]
      %v640 = vld [vmem:[%s620 + $0x98] sm:$0xff]
      %v641 = vld [vmem:[%s620 + $0xa0] sm:$0xff]
      %v642 = vld [vmem:[%s620 + $0xa8] sm:$0xff]
      %v643 = vld [vmem:[%s620 + $0xb0] sm:$0xff]
      %v644 = vld [vmem:[%s620 + $0xb8] sm:$0xff]
      %v645 = vld [vmem:[%s620 + $0xc0] sm:$0xff]
      %v646 = vld [vmem:[%s620 + $0xc8] sm:$0xff]
      %v647 = vld [vmem:[%s620 + $0xd0] sm:$0xff]
      %v648 = vld [vmem:[%s620 + $0xd8] sm:$0xff]
      %v649 = vld [vmem:[%s620 + $0xe0] sm:$0xff]
      %v650 = vld [vmem:[%s620 + $0xe8] sm:$0xff]
      %v651 = vld [vmem:[%s620 + $0xf0] sm:$0xff]
      %v652 = vld [vmem:[%s620 + $0xf8] sm:$0xff]
      %v653 = vld [vmem:[%s620 + $0x100] sm:$0xff]
      %v654 = vld [vmem:[%s620 + $0x108] sm:$0xff]
      %v655 = vld [vmem:[%s620 + $0x110] sm:$0xff]
      %v656 = vld [vmem:[%s620 + $0x118] sm:$0xff]
      %v658 = vsel %vm295, %v618, 0
      %v661 = vsel %vm295, %v619, 0
      %663 = vmatprep.subr.mxu0 0.0
      %664 = vmatpush1.msra.mxu0 0.0
      %665 = vmatprep.subr.mxu0 0.0
      %666 = vmatpush1.msra.mxu0 0.0
      %667 = vmatprep.subr.mxu0 0.0
      %668 = vmatpush1.msra.mxu0 0.0
      %669 = vmatprep.subr.mxu0 0.0
      %670 = vmatpush1.msra.mxu0 0.0
      %671 = vmatprep.subr.mxu0 0.0
      %672 = vmatpush1.msra.mxu0 0.0
      %673 = vmatprep.subr.mxu0 0.0
      %674 = vmatpush1.msra.mxu0 0.0
      %675 = vmatprep.subr.mxu0 0.0
      %676 = vmatpush1.msra.mxu0 0.0
      %677 = vmatprep.subr.mxu0 %v654
      %678 = vmatpush1.msra.mxu0 %v653
      %679 = vmatprep.subr.mxu0 %v650
      %680 = vmatpush1.msra.mxu0 %v649
      %681 = vmatprep.subr.mxu0 %v646
      %682 = vmatpush1.msra.mxu0 %v645
      %683 = vmatprep.subr.mxu0 %v642
      %684 = vmatpush1.msra.mxu0 %v641
      %685 = vmatprep.subr.mxu0 %v638
      %686 = vmatpush1.msra.mxu0 %v637
      %687 = vmatprep.subr.mxu0 %v634
      %688 = vmatpush1.msra.mxu0 %v633
      %689 = vmatprep.subr.mxu0 %v630
      %690 = vmatpush1.msra.mxu0 %v629
      %691 = vmatprep.subr.mxu0 %v626
      %692 = vmatpush1.msra.mxu0 %v625
      %693 = vmatprep.subr.mxu0 %v622
      %694 = vmatpush1.msra.mxu0 %v621
      %695 = vmatprep.subr.mxu0 0.0
      %696 = vmatpush2.msra.mxu0 0.0
      %697 = vmatprep.subr.mxu0 0.0
      %698 = vmatpush2.msra.mxu0 0.0
      %699 = vmatprep.subr.mxu0 0.0
      %700 = vmatpush2.msra.mxu0 0.0
      %701 = vmatprep.subr.mxu0 0.0
      %702 = vmatpush2.msra.mxu0 0.0
      %703 = vmatprep.subr.mxu0 0.0
      %704 = vmatpush2.msra.mxu0 0.0
      %705 = vmatprep.subr.mxu0 0.0
      %706 = vmatpush2.msra.mxu0 0.0
      %707 = vmatprep.subr.mxu0 0.0
      %708 = vmatpush2.msra.mxu0 0.0
      %709 = vmatprep.subr.mxu0 0.0
      %710 = vmatpush2.msra.mxu0 0.0
      %711 = vmatprep.subr.mxu0 0.0
      %712 = vmatpush2.msra.mxu0 0.0
      %713 = vmatprep.subr.mxu0 0.0
      %714 = vmatpush2.msra.mxu0 0.0
      %715 = vmatprep.subr.mxu0 0.0
      %716 = vmatpush2.msra.mxu0 0.0
      %717 = vmatprep.subr.mxu0 0.0
      %718 = vmatpush2.msra.mxu0 0.0
      %719 = vmatprep.subr.mxu0 0.0
      %720 = vmatpush2.msra.mxu0 0.0
      %721 = vmatprep.subr.mxu0 0.0
      %722 = vmatpush2.msra.mxu0 0.0
      %723 = vmatprep.subr.mxu0 0.0
      %724 = vmatpush2.msra.mxu0 0.0
      %725 = vmatprep.subr.mxu0 0.0
      %726 = vmatpush2.msra.mxu0 0.0
      %727 = vmatprep.mubr.f32.mxu0 0.0
      %728 = vmatmul.mubr.f32.gmra.mxu0 %v658
      %v729 = vpop.f32.mrf.mxu0
      %v730 = vadd.f32 0.0, %v729
      %v731 = vpop.f32.mrf.mxu0
      %v732 = vadd.f32 0.0, %v731
      %733 = vmatprep.mubr.f32.mxu0 0.0
      %734 = vmatmul.mubr.f32.gmra.mxu0 %v661
      %v735 = vpop.f32.mrf.mxu0
      %v736 = vadd.f32 0.0, %v735
      %v737 = vpop.f32.mrf.mxu0
      %v738 = vadd.f32 0.0, %v737
      %739 = vdwg.mxu0
      %740 = vmatprep.subr.mxu0 0.0
      %741 = vmatpush1.msra.mxu0 0.0
      %742 = vmatprep.subr.mxu0 0.0
      %743 = vmatpush1.msra.mxu0 0.0
      %744 = vmatprep.subr.mxu0 0.0
      %745 = vmatpush1.msra.mxu0 0.0
      %746 = vmatprep.subr.mxu0 0.0
      %747 = vmatpush1.msra.mxu0 0.0
      %748 = vmatprep.subr.mxu0 0.0
      %749 = vmatpush1.msra.mxu0 0.0
      %750 = vmatprep.subr.mxu0 0.0
      %751 = vmatpush1.msra.mxu0 0.0
      %752 = vmatprep.subr.mxu0 0.0
      %753 = vmatpush1.msra.mxu0 0.0
      %754 = vmatprep.subr.mxu0 %v656
      %755 = vmatpush1.msra.mxu0 %v655
      %756 = vmatprep.subr.mxu0 %v652
      %757 = vmatpush1.msra.mxu0 %v651
      %758 = vmatprep.subr.mxu0 %v648
      %759 = vmatpush1.msra.mxu0 %v647
      %760 = vmatprep.subr.mxu0 %v644
      %761 = vmatpush1.msra.mxu0 %v643
      %762 = vmatprep.subr.mxu0 %v640
      %763 = vmatpush1.msra.mxu0 %v639
      %764 = vmatprep.subr.mxu0 %v636
      %765 = vmatpush1.msra.mxu0 %v635
      %766 = vmatprep.subr.mxu0 %v632
      %767 = vmatpush1.msra.mxu0 %v631
      %768 = vmatprep.subr.mxu0 %v628
      %769 = vmatpush1.msra.mxu0 %v627
      %770 = vmatprep.subr.mxu0 %v624
      %771 = vmatpush1.msra.mxu0 %v623
      %772 = vmatprep.subr.mxu0 0.0
      %773 = vmatpush2.msra.mxu0 0.0
      %774 = vmatprep.subr.mxu0 0.0
      %775 = vmatpush2.msra.mxu0 0.0
      %776 = vmatprep.subr.mxu0 0.0
      %777 = vmatpush2.msra.mxu0 0.0
      %778 = vmatprep.subr.mxu0 0.0
      %779 = vmatpush2.msra.mxu0 0.0
      %780 = vmatprep.subr.mxu0 0.0
      %781 = vmatpush2.msra.mxu0 0.0
      %782 = vmatprep.subr.mxu0 0.0
      %783 = vmatpush2.msra.mxu0 0.0
      %784 = vmatprep.subr.mxu0 0.0
      %785 = vmatpush2.msra.mxu0 0.0
      %786 = vmatprep.subr.mxu0 0.0
      %787 = vmatpush2.msra.mxu0 0.0
      %788 = vmatprep.subr.mxu0 0.0
      %789 = vmatpush2.msra.mxu0 0.0
      %790 = vmatprep.subr.mxu0 0.0
      %791 = vmatpush2.msra.mxu0 0.0
      %792 = vmatprep.subr.mxu0 0.0
      %793 = vmatpush2.msra.mxu0 0.0
      %794 = vmatprep.subr.mxu0 0.0
      %795 = vmatpush2.msra.mxu0 0.0
      %796 = vmatprep.subr.mxu0 0.0
      %797 = vmatpush2.msra.mxu0 0.0
      %798 = vmatprep.subr.mxu0 0.0
      %799 = vmatpush2.msra.mxu0 0.0
      %800 = vmatprep.subr.mxu0 0.0
      %801 = vmatpush2.msra.mxu0 0.0
      %802 = vmatprep.subr.mxu0 0.0
      %803 = vmatpush2.msra.mxu0 0.0
      %804 = vmatprep.mubr.f32.mxu0 0.0
      %805 = vmatmul.mubr.f32.gmra.mxu0 %v658
      %v806 = vpop.f32.mrf.mxu0
      %v807 = vadd.f32 0.0, %v806
      %v808 = vpop.f32.mrf.mxu0
      %v809 = vadd.f32 0.0, %v808
      %810 = vmatprep.mubr.f32.mxu0 0.0
      %811 = vmatmul.mubr.f32.gmra.mxu0 %v661
      %v812 = vpop.f32.mrf.mxu0
      %v813 = vadd.f32 0.0, %v812
      %v814 = vpop.f32.mrf.mxu0
      %v815 = vadd.f32 0.0, %v814
      %816 = vdwg.mxu0
      %v817 = vadd.f32 %v529, %v730
      %v818 = vadd.f32 %v531, %v732
      %v819 = vadd.f32 %v606, %v807
      %v820 = vadd.f32 %v608, %v809
      %v821 = vadd.f32 %v535, %v736
      %v822 = vadd.f32 %v537, %v738
      %v823 = vadd.f32 %v612, %v813
      %v824 = vadd.f32 %v614, %v815
      %825 = vst [vmem:[%s205] sm:$0xff] %v817
      %826 = vst [vmem:[%s205 + $0x8] sm:$0xff] %v818
      %827 = vst [vmem:[%s205 + $0x10] sm:$0xff] %v819
      %828 = vst [vmem:[%s205 + $0x18] sm:$0xff] %v820
      %829 = vst [vmem:[%s205 + $0x20] sm:$0xff] %v821
      %830 = vst [vmem:[%s205 + $0x28] sm:$0xff] %v822
      %831 = vst [vmem:[%s205 + $0x30] sm:$0xff] %v823
      %832 = vst [vmem:[%s205 + $0x38] sm:$0xff] %v824
      %v833 = vadd.f32 %v817, %v821
      %v834 = vrot.slane %v833, 4
      %v835 = vadd.f32 %v833, %v834
      %v836 = vrot.slane %v835, 2
      %v837 = vadd.f32 %v835, %v836
      %v838 = vrot.slane %v837, 1
      %v839 = vadd.f32 %v837, %v838
      %v840 = vadd.f32 %v818, %v822
      %v841 = vrot.slane %v840, 4
      %v842 = vadd.f32 %v840, %v841
      %v843 = vrot.slane %v842, 2
      %v844 = vadd.f32 %v842, %v843
      %v845 = vrot.slane %v844, 1
      %v846 = vadd.f32 %v844, %v845
      %v847 = vadd.f32 %v819, %v823
      %v848 = vrot.slane %v847, 4
      %v849 = vadd.f32 %v847, %v848
      %v850 = vrot.slane %v849, 2
      %v851 = vadd.f32 %v849, %v850
      %v852 = vrot.slane %v851, 1
      %v853 = vadd.f32 %v851, %v852
      %v854 = vadd.f32 %v820, %v824
      %v855 = vrot.slane %v854, 4
      %v856 = vadd.f32 %v854, %v855
      %v857 = vrot.slane %v856, 2
      %v858 = vadd.f32 %v856, %v857
      %v859 = vrot.slane %v858, 1
      %v860 = vadd.f32 %v858, %v859
      %v861 = vmul.f32 %v817, %v817
      %v862 = vmul.f32 %v818, %v818
      %v863 = vmul.f32 %v819, %v819
      %v864 = vmul.f32 %v820, %v820
      %v865 = vmul.f32 %v821, %v821
      %v866 = vmul.f32 %v822, %v822
      %v867 = vmul.f32 %v823, %v823
      %v868 = vmul.f32 %v824, %v824
      %v869 = vadd.f32 %v861, %v865
      %v870 = vrot.slane %v869, 4
      %v871 = vadd.f32 %v869, %v870
      %v872 = vrot.slane %v871, 2
      %v873 = vadd.f32 %v871, %v872
      %v874 = vrot.slane %v873, 1
      %v875 = vadd.f32 %v873, %v874
      %v876 = vadd.f32 %v862, %v866
      %v877 = vrot.slane %v876, 4
      %v878 = vadd.f32 %v876, %v877
      %v879 = vrot.slane %v878, 2
      %v880 = vadd.f32 %v878, %v879
      %v881 = vrot.slane %v880, 1
      %v882 = vadd.f32 %v880, %v881
      %v883 = vadd.f32 %v863, %v867
      %v884 = vrot.slane %v883, 4
      %v885 = vadd.f32 %v883, %v884
      %v886 = vrot.slane %v885, 2
      %v887 = vadd.f32 %v885, %v886
      %v888 = vrot.slane %v887, 1
      %v889 = vadd.f32 %v887, %v888
      %v890 = vadd.f32 %v864, %v868
      %v891 = vrot.slane %v890, 4
      %v892 = vadd.f32 %v890, %v891
      %v893 = vrot.slane %v892, 2
      %v894 = vadd.f32 %v892, %v893
      %v895 = vrot.slane %v894, 1
      %v896 = vadd.f32 %v894, %v895
      %vm897 = vcmask 1040384
      %v898 = vsel %vm897, %v839, %v875
      %v899 = vsel %vm897, %v846, %v882
      %v900 = vsel %vm897, %v853, %v889
      %v901 = vsel %vm897, %v860, %v896
      %v906 = vcombine.low %v898, %v899
      %v907 = vcombine.low %v900, %v901
      %v909 = vunpack.c.l.s4 1983009808
      %v910 = vunpack.c.0.s8 %v909
      %v911 = vlaneseq
      %v912 = vshrl.u32 %v911, 7
      %v913 = vsub.s32 %v910, %v912
      %v914 = vrot.slane %v906, %v913
      %v916 = vunpack.c.l.s4 1983009808
      %v917 = vunpack.c.0.s8 %v916
      %v918 = vlaneseq
      %v919 = vshrl.u32 %v918, 7
      %v920 = vsub.s32 %v917, %v919
      %v921 = vrot.slane %v907, %v920
      %v922 = vcombine.low %v914, %v921
      %924 = vst [vmem:[%s212] sm:$0xff] %v922
      %s925 = smul.u32 2, %s20
      %p926 = scmp.lt.s32.totalorder %s19, 1
      %s927 = scalar_select %p926, %s19, 1
      %p928 = scmp.lt.s32.totalorder %s925, 1
      %s929 = scalar_select %p928, %s925, 1
      %s930 = smul.addr %s929, 4
      %s931 = smul.addr %s927, 8
      %s932 = sadd.s32 %s930, %s931
      %s933 = smul.addr %s932, 8
      %s934 = scalar_lea.vmem %s2, %s933
      %s935 = sadd.s32 %s19, %s20
      %p936 = scmp.lt.s32.totalorder %s935, 1
      %s937 = scalar_select %p936, %s935, 1
      %s938 = smul.addr %s937, 4
      %s939 = smul.addr %s938, 2
      %s940 = scalar_lea.vmem %s3, %s939
      // Predicated region
      $region29: #{upsample2_bloc.1} parent=27 // pred_check
        %p941 = pneg %p94
      $region30: #{upsample2_bloc.1} parent=27 // pred_check_branch
        %943 = sbr.rel (%p941) target = $region32
      $region31: #{upsample2_bloc.1} parent=27 // pred_region
        %s944 = smul.u32 2, %s20
      $region32: #{upsample2_bloc.1} parent=27 // pred_fallthru
        _
      // Predicated region
      $region33: #{upsample2_bloc.1} parent=27 // pred_check
        %p945 = pneg %p122
      $region34: #{upsample2_bloc.1} parent=27 // pred_check_branch
        %947 = sbr.rel (%p945) target = $region36
      $region35: #{upsample2_bloc.1} parent=27 // pred_region
        %s948 = sadd.s32 %s19, %s20
      $region36: #{upsample2_bloc.1} parent=27 // pred_fallthru
        _
    $region28: #{upsample2_bloc.1} parent=5 // pred_fallthru
      _
    %p949 = scmp.le.s32.totalorder 2, %s10
    // Predicated region
    $region37: #{upsample2_bloc.1} parent=5 // pred_check
      %p950 = pneg %p949
    $region38: #{upsample2_bloc.1} parent=5 // pred_check_branch
      %952 = sbr.rel (%p950) target = $region40
    $region39: #{upsample2_bloc.1} parent=5 // pred_region
      %s953 = ssub.s32 %s10, 2
      // Predicated region
      $region41: #{upsample2_bloc.1} parent=39 // pred_check
        %p954 = pneg %p100
      $region42: #{upsample2_bloc.1} parent=39 // pred_check_branch
        %956 = sbr.rel (%p954) target = $region44
      $region43: #{upsample2_bloc.1} parent=39 // pred_region
        %s957 = smul.u32 2, %s22
        %p958 = scmp.lt.s32.totalorder %s21, 1
        %s959 = scalar_select %p958, %s21, 1
        %p960 = scmp.lt.s32.totalorder %s957, 1
        %s961 = scalar_select %p960, %s957, 1
        %s962 = smul.addr %s961, 4
        %s963 = smul.addr %s959, 8
        %s964 = sadd.s32 %s962, %s963
        %s965 = smul.addr %s964, 8
        %s966 = scalar_lea.vmem %s2, %s965
      $region44: #{upsample2_bloc.1} parent=39 // pred_fallthru
        _
      // Predicated region
      $region45: #{upsample2_bloc.1} parent=39 // pred_check
        %p967 = pneg %p128
      $region46: #{upsample2_bloc.1} parent=39 // pred_check_branch
        %969 = sbr.rel (%p967) target = $region48
      $region47: #{upsample2_bloc.1} parent=39 // pred_region
        %s970 = sadd.s32 %s21, %s22
        %p971 = scmp.lt.s32.totalorder %s970, 1
        %s972 = scalar_select %p971, %s970, 1
        %s973 = smul.addr %s972, 4
        %s974 = smul.addr %s973, 2
        %s975 = scalar_lea.vmem %s3, %s974
      $region48: #{upsample2_bloc.1} parent=39 // pred_fallthru
        _
    $region40: #{upsample2_bloc.1} parent=5 // pred_fallthru
      _
  $region6: #{upsample2_bloc.1} parent=0 // loop_footer
    %s14 = sadd.s32 1, %s10
  $region7: #{upsample2_bloc.1} parent=0 // loop_footer_branch
    %9 = sbr.rel target = $region3
  $region8: #{upsample2_bloc.1} parent=0 // loop_exit
    _

</llo_original>
